<compile_context>
chip_gen: v7x
topology: tpu7x:2x2x1
jax: 0.10.0
libtpu: 0.0.40
codegen_flags: <defaults>
</compile_context>

<pallas_src>
import math
from functools import partial

import jax
import jax.numpy as jnp
from jax.experimental import pallas as pl
from jax.experimental.pallas import tpu as pltpu


# ----------------------------------------------------------------------------
# Kernel
# ----------------------------------------------------------------------------

def _rmsnorm_kernel(x_ref, w_ref, o_ref, *, eps):
    # One (br, D) tile per grid step; D fully resident on the lane axis so the
    # mean over the model dimension is exact and stores are lane-dense.
    x = x_ref[...].astype(jnp.float32)
    ms = jnp.mean(x * x, axis=-1, keepdims=True)
    xn = (x * jax.lax.rsqrt(ms + eps)).astype(x_ref.dtype)   # ._norm(x.float()).type_as(x)
    o_ref[...] = (xn * w_ref[...]).astype(o_ref.dtype)       # * self.weight


# ----------------------------------------------------------------------------
# Wrapper
# ----------------------------------------------------------------------------

def _round_up(n, m):
    return ((n + m - 1) // m) * m


def _cdiv(a, b):
    return -(-a // b)


_VMEM_TILE_BUDGET = 24 * 1024 * 1024   # pipelined activation bytes (fits v7x 64MiB/TC)
_VMEM_LIMIT = 32 * 1024 * 1024         # explicit scoped-VMEM limit (raises v5e's 16MiB)


def _choose_block_rows(rows, D, sub, in_item, out_item, block_rows):
    # Double-buffered in + out blocks plus ~2 f32 temporaries inside the kernel.
    bytes_per_row = (2 * (in_item + out_item) + 8) * D
    br = max(sub, (_VMEM_TILE_BUDGET // bytes_per_row) // sub * sub)
    if block_rows is not None:
        br = min(br, max(sub, (block_rows // sub) * sub))
    br = min(br, _round_up(rows, sub))

    steps = _cdiv(rows, br)
    # v7x has 2 TensorCores sharing the "parallel" row axis; each wants >=2
    # steps for its own double-buffering -> aim for >=4 steps when possible.
    min_steps = 4
    if steps < min_steps:
        br_small = max(sub, _round_up(_cdiv(rows, min_steps), sub))
        if br_small < br:
            br = br_small
            steps = _cdiv(rows, br)
    # Prefer an even step count so the two cores stay balanced (cheap nudge).
    if steps >= min_steps and steps % 2 == 1:
        br_even = max(sub, _round_up(_cdiv(rows, steps + 1), sub))
        if _cdiv(rows, br_even) % 2 == 0:
            br = br_even
    return br


@partial(jax.jit, static_argnames=("eps", "block_rows"))
def rmsnorm(x, weight, *, eps=1e-6, block_rows=None):
    orig_shape = x.shape
    D = orig_shape[-1]
    rows = int(math.prod(orig_shape[:-1])) if len(orig_shape) > 1 else 1
    # torch: (norm result cast to x.dtype) * weight -> promoted dtype
    out_dtype = jnp.promote_types(x.dtype, weight.dtype)

    x2 = x.reshape(rows, D)           # leading-dim flatten: no data movement
    w2 = weight.reshape(1, D)

    # Sublane packing of the narrowest activation dtype (f32:8, bf16:16, int8:32).
    packing = max(1, 4 // jnp.dtype(x.dtype).itemsize)
    sub = 8 * packing

    br = _choose_block_rows(
        rows, D, sub,
        jnp.dtype(x.dtype).itemsize, jnp.dtype(out_dtype).itemsize,
        block_rows)
    grid = (pl.cdiv(rows, br),)       # ragged tail handled by Pallas OOB masking

    out = pl.pallas_call(
        partial(_rmsnorm_kernel, eps=eps),
        out_shape=jax.ShapeDtypeStruct((rows, D), out_dtype),
        grid=grid,
        in_specs=[
            pl.BlockSpec((br, D), lambda i: (i, 0)),   # row-tiled activations
            pl.BlockSpec((1, D), lambda i: (0, 0)),    # weight, same block every step
        ],
        out_specs=pl.BlockSpec((br, D), lambda i: (i, 0)),
        compiler_params=pltpu.CompilerParams(
            dimension_semantics=("parallel",),         # shard rows across TensorCores
            vmem_limit_bytes=_VMEM_LIMIT,
        ),
    )(x2, w2)

    return out.reshape(orig_shape[:-1] + (D,)) if out_dtype == x.dtype else \
        out.reshape(orig_shape[:-1] + (D,))


# ----------------------------------------------------------------------------
# Pure-JAX reference (mirrors the PyTorch forward exactly)
# ----------------------------------------------------------------------------

def rmsnorm_ref(x, weight, eps=1e-6):
    xf = x.astype(jnp.float32)
    ms = jnp.mean(xf * xf, axis=-1, keepdims=True)
    xn = (xf * jax.lax.rsqrt(ms + eps)).astype(x.dtype)
    return xn * weight


# ----------------------------------------------------------------------------
# Main
# ----------------------------------------------------------------------------

if __name__ == "__main__":
    key = jax.random.PRNGKey(0)
    k1, k2, k3, k4 = jax.random.split(key, 4)

    # Case 1: f32, (batch=2, seq=8, dim=256) -> 16 rows; exercises the
    # >=4-step / even-grid nudge (br shrinks to 8 rows -> 2 steps here).
    D1 = 256
    x1 = jax.random.normal(k1, (2, 8, D1), jnp.float32)
    w1 = 1.0 + 0.02 * jax.random.normal(k2, (D1,), jnp.float32)
    y1 = rmsnorm(x1, w1)
    jax.block_until_ready(y1)
    r1 = rmsnorm_ref(x1, w1)
    assert y1.shape == x1.shape and y1.dtype == jnp.float32, (y1.shape, y1.dtype)
    assert bool(jnp.all(jnp.isfinite(y1)))
    assert bool(jnp.allclose(y1, r1, atol=2e-5, rtol=2e-5))

    # Case 2: bf16 input, ragged row count (3*5=15 rows -> partial tail tile,
    # no pad/slice), f32 weight -> f32 output per torch promotion.
    D2 = 384
    x2 = jax.random.normal(k3, (3, 5, D2), jnp.float32).astype(jnp.bfloat16)
    w2 = jnp.ones((D2,), jnp.float32)
    y2 = rmsnorm(x2, w2)
    jax.block_until_ready(y2)
    r2 = rmsnorm_ref(x2, w2)
    assert y2.shape == x2.shape and y2.dtype == jnp.float32, (y2.shape, y2.dtype)
    assert bool(jnp.all(jnp.isfinite(y2)))
    assert bool(jnp.allclose(y2, r2, atol=2e-2, rtol=2e-2))

    # Case 3: bf16 input + bf16 weight (LLaMA-style model dtype) -> bf16 output,
    # halving the HBM writeback; ragged rows again (4*7=28 rows, 16-row tiles).
    D3 = 256
    x3 = jax.random.normal(k4, (4, 7, D3), jnp.float32).astype(jnp.bfloat16)
    w3 = jnp.ones((D3,), jnp.bfloat16)
    y3 = rmsnorm(x3, w3)
    jax.block_until_ready(y3)
    r3 = rmsnorm_ref(x3, w3)
    assert y3.shape == x3.shape and y3.dtype == jnp.bfloat16, (y3.shape, y3.dtype)
    assert bool(jnp.all(jnp.isfinite(y3.astype(jnp.float32))))
    assert bool(jnp.allclose(y3.astype(jnp.float32), r3.astype(jnp.float32),
                             atol=2e-2, rtol=2e-2))

    print("KERNEL_OK")
</pallas_src>

<mosaic_0001>
module attributes {stable_mosaic.version = 11 : i64} {
  func.func @_rmsnorm_kernel(%arg0: i32, %arg1: memref<8x256xf32, #tpu.memory_space<vmem>>, %arg2: memref<1x256xf32, #tpu.memory_space<vmem>>, %arg3: memref<8x256xf32, #tpu.memory_space<vmem>>) attributes {dimension_semantics = [#tpu.dimension_semantics<parallel>], iteration_bounds = array<i64: 2>, scalar_prefetch = 0 : i64, scratch_operands = 0 : i64, tpu.core_type = #tpu.core_type<tc>, window_params = [{transform_indices = @transform_0, window_bounds = array<i64: 8, 256>}, {pipeline_mode = #tpu.pipeline_mode<synchronous>, transform_indices = @transform_1, window_bounds = array<i64: 1, 256>}, {transform_indices = @transform_2, window_bounds = array<i64: 8, 256>}]} {
    %c0 = arith.constant 0 : index
    %c0_0 = arith.constant 0 : index
    %0 = vector.load %arg1[%c0, %c0_0] : memref<8x256xf32, #tpu.memory_space<vmem>>, vector<8x256xf32>
    %1 = arith.mulf %0, %0 : vector<8x256xf32>
    %cst = arith.constant dense<0.000000e+00> : vector<8xf32>
    %2 = vector.multi_reduction <add>, %1, %cst [1] : vector<8x256xf32> to vector<8xf32>
    %3 = vector.shape_cast %2 : vector<8xf32> to vector<8x1xf32>
    %cst_1 = arith.constant 2.560000e+02 : f32
    %4 = vector.broadcast %cst_1 : f32 to vector<8x1xf32>
    %5 = arith.divf %3, %4 : vector<8x1xf32>
    %cst_2 = arith.constant 9.99999997E-7 : f32
    %6 = vector.broadcast %cst_2 : f32 to vector<8x1xf32>
    %7 = arith.addf %5, %6 : vector<8x1xf32>
    %8 = math.rsqrt %7 : vector<8x1xf32>
    %9 = vector.broadcast %8 : vector<8x1xf32> to vector<8x256xf32>
    %10 = arith.mulf %0, %9 : vector<8x256xf32>
    %c0_3 = arith.constant 0 : index
    %c0_4 = arith.constant 0 : index
    %11 = vector.load %arg2[%c0_3, %c0_4] : memref<1x256xf32, #tpu.memory_space<vmem>>, vector<1x256xf32>
    %12 = vector.broadcast %11 : vector<1x256xf32> to vector<8x256xf32>
    %13 = arith.mulf %10, %12 : vector<8x256xf32>
    %c0_5 = arith.constant 0 : index
    %c0_6 = arith.constant 0 : index
    %14 = vector.load %arg3[%c0_5, %c0_6] : memref<8x256xf32, #tpu.memory_space<vmem>>, vector<8x256xf32>
    tpu.vector_store %arg3[%c0_5, %c0_6], %13 {strides = array<i32>} : memref<8x256xf32, #tpu.memory_space<vmem>>, vector<8x256xf32>,
    return
  }
  func.func @transform_0(%arg0: i32) -> (i32, i32) {
    %c0_i32 = arith.constant 0 : i32
    %c0_i32_0 = arith.constant 0 : i32
    return %arg0, %c0_i32 : i32, i32
  }
  func.func @transform_1(%arg0: i32) -> (i32, i32) {
    %c0_i32 = arith.constant 0 : i32
    %c0_i32_0 = arith.constant 0 : i32
    %c0_i32_1 = arith.constant 0 : i32
    return %c0_i32, %c0_i32_0 : i32, i32
  }
  func.func @transform_2(%arg0: i32) -> (i32, i32) {
    %c0_i32 = arith.constant 0 : i32
    %c0_i32_0 = arith.constant 0 : i32
    return %arg0, %c0_i32 : i32, i32
  }
}

</mosaic_0001>

<llo_original>
// kernel: rmsnorm.1
$region0: #{rmsnorm.1}
  #allocation0 [shape = 'u32[]', space=smem, size = 0x4, offset = 0x4, fixed_abs, tag = 'smem constant byte address 0x4 - core index']
  #allocation1 [shape = 'u32[144,128]{1,0:T(1,128)}', space=vmem, size = 0x12000, scoped, tag = 'internal scratch']
  %s0 = inlined_call_operand.hbm [shape: f32[16,256], index: 0, kind: input, shape index: {}]
  %s1 = inlined_call_operand.vmem [shape: f32[1,256], index: 1, kind: input, shape index: {}]
  %s2 = inlined_call_operand.hbm [shape: f32[16,256], index: 2, kind: output, shape index: {}]
  %s3 = sld [smem:[#allocation0]]
  $region45: #{rmsnorm.1} parent=0
    _
  %s5 = ssub.s32 1, %s3
  %s6 = scalar_select 0, %s5, %s3
  $region1: #{rmsnorm.1} parent=0
    #allocation2 [shape = 'u8[16384]{0}', space=vmem, size = 0x4000, scoped, tag = 'input window, operand 0']
    #allocation3 [shape = 's32[2]{0}', space=sflag, size = 0x8, scoped, tag = 'scoped memory for rmsnorm.1']
    #allocation4 [shape = 's32[2]{0}', space=sflag, size = 0x8, scoped, tag = 'scoped memory for rmsnorm.1']
    #allocation5 [shape = 'u8[16384]{0}', space=vmem, size = 0x4000, scoped, tag = 'output window, operand 0']
    %7 = vsyncpa [#allocation3], 0
    %s8 = scalar_lea.sflag [#allocation3], 1
    %9 = vsyncpa %s8, 0
    %10 = vsyncpa [#allocation4], 0
    %s11 = scalar_lea.sflag [#allocation4], 1
    %12 = vsyncpa %s11, 0
    loop: start=0, step=1, limit=4
    $region2: #{rmsnorm.1} parent=1 // loop_pre_header
      _
    $region3: #{rmsnorm.1} parent=1 // loop_header
      %s14 = sphi 0, %s18
      %p15 = scmp.ge.s32.totalorder %s14, 4
      %s24 = sphi 0, %s26
      %s27 = sphi 0, %s24
      %s28 = sphi 0, %s27
      %s44 = sphi 0, %s28
      %s48 = sphi 0, %s48
      %s50 = sphi 0, %s48
      %s51 = sphi 0, %s50
      %s65 = sphi 0, %s51
      %s71 = sphi 0, %s73
      %s74 = sphi 0, %s71
      %s75 = sphi 0, %s74
      %s91 = sphi 0, %s75
    $region4: #{rmsnorm.1} parent=1 // loop_header_branch
      %17 = sbr.rel (%p15) target = $region8
    $region5: #{rmsnorm.1} parent=1 // loop_body
      %s19 = ssub.s32 %s14, 1
      %s20 = ssub.s32 %s14, 2
      %s21 = sadd.s32 %s14, 1
      %s22 = ssub.s32 %s14, %s21
      %p23 = scmp.eq.s32.totalorder %s22, 0
      %s25 = sadd.s32 %s24, 1
      %s26 = scalar_select %p23, %s24, %s25
      %p29 = pneg %p23
      %p30 = scmp.eq.s32.totalorder %s14, 1
      %p31 = por %p29, %p30
      %p32 = scmp.ne.s32.totalorder %s24, %s27
      %p33 = scmp.eq.s32.totalorder %s14, 0
      %p34 = por %p32, %p33
      %p35 = scmp.ne.s32.totalorder %s24, %s27
      %p36 = scmp.eq.s32.totalorder %s19, 1
      %p37 = por %p35, %p36
      %p38 = scmp.ne.s32.totalorder %s27, %s28
      %p39 = scmp.eq.s32.totalorder %s19, 0
      %p40 = por %p38, %p39
      %p41 = scmp.ne.s32.totalorder %s27, %s28
      %p42 = scmp.eq.s32.totalorder %s20, 1
      %p43 = por %p41, %p42
      %p45 = scmp.ne.s32.totalorder %s28, %s44
      %p46 = scmp.eq.s32.totalorder %s20, 0
      %p47 = por %p45, %p46
      %s49 = sadd.s32 %s48, 1
      %p52 = scmp.eq.s32.totalorder %s14, 1
      %p53 = scmp.ne.s32.totalorder %s48, %s50
      %p54 = scmp.eq.s32.totalorder %s14, 0
      %p55 = por %p53, %p54
      %p56 = scmp.ne.s32.totalorder %s48, %s50
      %p57 = scmp.eq.s32.totalorder %s19, 1
      %p58 = por %p56, %p57
      %p59 = scmp.ne.s32.totalorder %s50, %s51
      %p60 = scmp.eq.s32.totalorder %s19, 0
      %p61 = por %p59, %p60
      %p62 = scmp.ne.s32.totalorder %s50, %s51
      %p63 = scmp.eq.s32.totalorder %s20, 1
      %p64 = por %p62, %p63
      %p66 = scmp.ne.s32.totalorder %s51, %s65
      %p67 = scmp.eq.s32.totalorder %s20, 0
      %p68 = por %p66, %p67
      %s69 = ssub.s32 %s14, %s21
      %p70 = scmp.eq.s32.totalorder %s69, 0
      %s72 = sadd.s32 %s71, 1
      %s73 = scalar_select %p70, %s71, %s72
      %p76 = pneg %p70
      %p77 = scmp.eq.s32.totalorder %s14, 1
      %p78 = por %p76, %p77
      %p79 = scmp.ne.s32.totalorder %s71, %s74
      %p80 = scmp.eq.s32.totalorder %s14, 0
      %p81 = por %p79, %p80
      %p82 = scmp.ne.s32.totalorder %s71, %s74
      %p83 = scmp.eq.s32.totalorder %s19, 1
      %p84 = por %p82, %p83
      %p85 = scmp.ne.s32.totalorder %s74, %s75
      %p86 = scmp.eq.s32.totalorder %s19, 0
      %p87 = por %p85, %p86
      %p88 = scmp.ne.s32.totalorder %s74, %s75
      %p89 = scmp.eq.s32.totalorder %s20, 1
      %p90 = por %p88, %p89
      %p92 = scmp.ne.s32.totalorder %s75, %s91
      %p93 = scmp.eq.s32.totalorder %s20, 0
      %p94 = por %p92, %p93
      %p95 = scmp.le.s32.totalorder 1, %s14
      %p96 = scmp.lt.s32.totalorder %s14, 3
      %p97 = pnand %p95, %p96
      %p98 = pneg %p97
      // Predicated region
      $region9: #{rmsnorm.1} parent=5 // pred_check
        _
      $region10: #{rmsnorm.1} parent=5 // pred_check_branch
        %100 = sbr.rel (%p97) target = $region12
      $region11: #{rmsnorm.1} parent=5 // pred_region
        %s101 = ssub.s32 %s14, 1
        // Predicated region
        $region13: #{rmsnorm.1} parent=11 // pred_check
          %p102 = pneg %p61
        $region14: #{rmsnorm.1} parent=11 // pred_check_branch
          %104 = sbr.rel (%p102) target = $region16
        $region15: #{rmsnorm.1} parent=11 // pred_region
          _
        $region16: #{rmsnorm.1} parent=11 // pred_fallthru
          _
      $region12: #{rmsnorm.1} parent=5 // pred_fallthru
        _
      %p105 = scmp.lt.s32.totalorder %s14, 2
      // Predicated region
      $region17: #{rmsnorm.1} parent=5 // pred_check
        %p106 = pneg %p105
      $region18: #{rmsnorm.1} parent=5 // pred_check_branch
        %108 = sbr.rel (%p106) target = $region20
      $region19: #{rmsnorm.1} parent=5 // pred_region
        // Predicated region
        $region21: #{rmsnorm.1} parent=19 // pred_check
          %p109 = pneg %p34
        $region22: #{rmsnorm.1} parent=19 // pred_check_branch
          %111 = sbr.rel (%p109) target = $region24
        $region23: #{rmsnorm.1} parent=19 // pred_region
          %s112 = sand.u32 %s24, 1
          %s113 = scalar_lea.sflag [#allocation3], %s112
          %s114 = sand.u32 %s24, 1
          %s115 = smul.addr %s114, 16
          %s116 = scalar_lea.vmem [#allocation2], %s115
          %s118 = ssub.s32 256, 256
          %119 = vsyncadd %s113, %s118
          %s120 = smul.addr %s14, 2
          %s121 = smul.addr %s120, 128
          %s122 = scalar_lea.hbm %s0, %s121
          %s124 = sshll.u32 %s116, 4
          %s125 = int_to_ptr.vmem [resolvable:$true] %s124
          %127 = dma.hbm_to_vmem [thread:$0]  %s122, 256, %s125, %s113
        $region24: #{rmsnorm.1} parent=19 // pred_fallthru
          _
      $region20: #{rmsnorm.1} parent=5 // pred_fallthru
        _
      %p128 = scmp.le.s32.totalorder 1, %s14
      %p129 = scmp.lt.s32.totalorder %s14, 3
      %p130 = pnand %p128, %p129
      %p131 = pneg %p130
      // Predicated region
      $region25: #{rmsnorm.1} parent=5 // pred_check
        _
      $region26: #{rmsnorm.1} parent=5 // pred_check_branch
        %133 = sbr.rel (%p130) target = $region28
      $region27: #{rmsnorm.1} parent=5 // pred_region
        %s134 = ssub.s32 %s14, 1
        %s135 = sand.u32 %s27, 1
        %s136 = scalar_lea.sflag [#allocation3], %s135
        %s137 = sand.u32 %s27, 1
        %s138 = smul.addr %s137, 16
        %s139 = scalar_lea.vmem [#allocation2], %s138
        // Predicated region
        $region29: #{rmsnorm.1} parent=27 // pred_check
          %p140 = pneg %p40
        $region30: #{rmsnorm.1} parent=27 // pred_check_branch
          %142 = sbr.rel (%p140) target = $region32
        $region31: #{rmsnorm.1} parent=27 // pred_region
          %143 = dma.done %s136, 256
        $region32: #{rmsnorm.1} parent=27 // pred_fallthru
          _
        %s144 = sand.u32 %s27, 1
        %s145 = scalar_lea.sflag [#allocation3], %s144
        %s146 = sand.u32 %s27, 1
        %s147 = smul.addr %s146, 16
        %s148 = scalar_lea.vmem [#allocation2], %s147
        %p149 = pneg %p40
        %p150 = pneg %p37
        %p151 = pneg %p61
        %p152 = pneg %p58
        %p153 = pneg %p87
        %p154 = pneg %p84
        %s155 = sand.u32 %s74, 1
        %s156 = scalar_lea.sflag [#allocation4], %s155
        %s157 = sand.u32 %s74, 1
        %s158 = smul.addr %s157, 16
        %s159 = scalar_lea.vmem [#allocation5], %s158
        %v160 = vld [vmem:[%s139] sm:$0xff]
        %v161 = vld [vmem:[%s139 + $0x8] sm:$0xff]
        %v162 = vmul.f32 %v160, %v160
        %v163 = vmul.f32 %v161, %v161
        %v164 = vadd.f32 %v162, %v163
        %165 = vadd.xlane.f32.xlu0 %v164
        %v166 = vpop.xlane.xlu0 %165
        %v167 = vrcp.pop 256.0
        %v168 = vmul.f32 %v166, %v167
        %v169 = vadd.f32 %v168, 1e-06
        %v170 = vrsqrt.pop %v169
        %v171 = vmul.f32 %v160, %v170
        %v172 = vmul.f32 %v161, %v170
        %v173 = vld [vmem:[%s1] sm:$0x3]
        %v175 = vlaneseq
        %v176 = vshrl.u32 %v175, 7
        %v177 = vsub.s32 0, %v176
        %v178 = vrot.slane %v173, %v177
        %v179 = vlaneseq
        %v180 = vshrl.u32 %v179, 7
        %v181 = vsub.s32 1, %v180
        %v182 = vrot.slane %v173, %v181
        %v185 = vmul.f32 %v171, %v178
        %v186 = vmul.f32 %v172, %v182
        %187 = vst [vmem:[%s159] sm:$0xff] %v185
        %188 = vst [vmem:[%s159 + $0x8] sm:$0xff] %v186
        %s189 = sand.u32 %s74, 1
        %s190 = scalar_lea.sflag [#allocation4], %s189
        %s191 = sand.u32 %s74, 1
        %s192 = smul.addr %s191, 16
        %s193 = scalar_lea.vmem [#allocation5], %s192
        // Predicated region
        $region33: #{rmsnorm.1} parent=27 // pred_check
          %p194 = pneg %p84
        $region34: #{rmsnorm.1} parent=27 // pred_check_branch
          %196 = sbr.rel (%p194) target = $region36
        $region35: #{rmsnorm.1} parent=27 // pred_region
          %s198 = ssub.s32 256, 256
          %199 = vsyncadd %s190, %s198
          %s200 = smul.addr %s19, 2
          %s201 = smul.addr %s200, 128
          %s202 = scalar_lea.hbm %s2, %s201
          %s204 = sshll.u32 %s193, 4
          %s205 = int_to_ptr.vmem [resolvable:$true] %s204
          %207 = dma.vmem_to_hbm [thread:$0]  %s205, 256, %s202, %s190
        $region36: #{rmsnorm.1} parent=27 // pred_fallthru
          _
      $region28: #{rmsnorm.1} parent=5 // pred_fallthru
        _
      %p208 = scmp.le.s32.totalorder 2, %s14
      // Predicated region
      $region37: #{rmsnorm.1} parent=5 // pred_check
        %p209 = pneg %p208
      $region38: #{rmsnorm.1} parent=5 // pred_check_branch
        %211 = sbr.rel (%p209) target = $region40
      $region39: #{rmsnorm.1} parent=5 // pred_region
        %s212 = ssub.s32 %s14, 2
        // Predicated region
        $region41: #{rmsnorm.1} parent=39 // pred_check
          %p213 = pneg %p90
        $region42: #{rmsnorm.1} parent=39 // pred_check_branch
          %215 = sbr.rel (%p213) target = $region44
        $region43: #{rmsnorm.1} parent=39 // pred_region
          %s216 = sand.u32 %s75, 1
          %s217 = scalar_lea.sflag [#allocation4], %s216
          %s218 = sand.u32 %s75, 1
          %s219 = smul.addr %s218, 16
          %s220 = scalar_lea.vmem [#allocation5], %s219
          %221 = dma.done %s217, 256
        $region44: #{rmsnorm.1} parent=39 // pred_fallthru
          _
      $region40: #{rmsnorm.1} parent=5 // pred_fallthru
        _
    $region6: #{rmsnorm.1} parent=1 // loop_footer
      %s18 = sadd.s32 1, %s14
    $region7: #{rmsnorm.1} parent=1 // loop_footer_branch
      %13 = sbr.rel target = $region3
    $region8: #{rmsnorm.1} parent=1 // loop_exit
      _
    %222 = vsyncpa [#allocation3], 1
    %s223 = scalar_lea.sflag [#allocation3], 1
    %224 = vsyncpa %s223, 1
    %225 = vsyncpa [#allocation4], 1
    %s226 = scalar_lea.sflag [#allocation4], 1
    %227 = vsyncpa %s226, 1

</llo_original>
